<compile_context>
chip_gen: v7x
topology: tpu7x:2x2x1
jax: 0.10.0
libtpu: 0.0.40
codegen_flags: <defaults>
</compile_context>

<pallas_src>
import jax
import jax.numpy as jnp
from jax.experimental import pallas as pl
from jax.experimental.pallas import tpu as pltpu


def _eca_kernel(band_ref, x_ref, o_ref):
    # band_ref : VMEM (C, C)       -- transposed 3-tap conv band (grid-invariant)
    # x_ref    : VMEM (BB, C, HW)  -- BB batch elements; channels on sublanes,
    #                                 spatial (lane-dense) on lanes
    # o_ref    : VMEM (BB, C, HW)
    xb = x_ref[...]                                                  # (BB, C, HW)

    # Global average pool over the spatial (lane) axis; accumulate in f32
    # without materializing a full-size f32 copy of the block.
    m = jnp.mean(xb, axis=-1, dtype=jnp.float32)                     # (BB, C) f32

    # 3-tap channel conv (zero-padded, no bias) as a small MXU matmul:
    # conv[b, i] = w0*m[b, i-1] + w1*m[b, i] + w2*m[b, i+1].
    conv = jnp.dot(m.astype(band_ref.dtype), band_ref[...],
                   preferred_element_type=jnp.float32)               # (BB, C) f32

    # Sigmoid gate (EUP); rescale + store run in the input dtype.
    gate = jax.nn.sigmoid(conv).astype(xb.dtype)                     # (BB, C)
    o_ref[...] = xb * gate[:, :, None]


def _conv_band_t(conv_weight, C):
    """Transposed (C, C) band reproducing Conv1d(1, 1, k=3, pad=1, bias=False) over C.

    Built so that (means @ band_t)[b, i] = w0*m[b,i-1] + w1*m[b,i] + w2*m[b,i+1]
    with zero padding at the channel edges.  Built once per call in plain JAX.
    """
    w = conv_weight.reshape(-1).astype(jnp.float32)                  # (3,)
    rows = jnp.arange(C)[:, None]                                    # input channel j
    cols = jnp.arange(C)[None, :]                                    # output channel i
    d = cols - rows
    band_t = (jnp.where(d == 1, w[0], jnp.float32(0.0))
              + jnp.where(d == 0, w[1], jnp.float32(0.0))
              + jnp.where(d == -1, w[2], jnp.float32(0.0)))          # (C, C)
    return band_t


def _pick_batch_block(B, C, HW, itemsize, band_bytes):
    """Choose the batch-group size BB and the scoped-VMEM limit.

    BB is the largest divisor of B such that:
      * one (BB, C, HW) block is <= ~4 MiB (HBM-roofline sweet spot),
      * in + out blocks, each double-buffered, plus the resident band plus an
        8 MiB margin fit physical VMEM (v7x 64 MiB/TC is the binding case),
      * at least 2 grid steps remain when B >= 2 (v7x megacore parallelism).
    """
    try:
        cap = int(pltpu.get_tpu_info().vmem_capacity_bytes)
    except Exception:
        cap = 64 * 1024 * 1024        # conservative fallback: v7x has 64 MiB / TC

    margin = 8 * 1024 * 1024          # Mosaic internal scratch + headroom
    budget = cap - 2 * band_bytes - margin
    per_elem = C * HW * itemsize

    max_block = max(per_elem, budget // 4)           # in+out, double-buffered
    target = min(4 * 1024 * 1024, max_block)

    bb = 1
    for d in range(1, B + 1):
        if B % d != 0:
            continue
        if d * per_elem > target:
            break
        if B >= 2 and B // d < 2:     # keep >= 2 grid steps for megacore
            break
        bb = d

    block_bytes = bb * per_elem
    if 4 * block_bytes + 2 * band_bytes + margin > cap:
        # TODO(synk): channel-tiled grid (B, C//TC) with a ±1-channel halo for
        # shapes whose single-batch block cannot be double-buffered in VMEM
        # (only relevant for very large C*HW on v7x's 64 MiB / TC).
        pass

    need = 4 * block_bytes + 2 * band_bytes + margin
    vmem_limit = max(16 * 1024 * 1024, min(need, cap))
    return bb, vmem_limit


def eca_forward(x, conv_weight, *, donate_x=False):
    """ECA forward pass.

    x           : (B, C, H, W)
    conv_weight : Conv1d weight, shape (3,) or (1, 1, 3)
    donate_x    : alias x's HBM buffer to the output (use only if x is dead after).
    """
    B, C, H, W = x.shape
    HW = H * W
    # Flatten spatial dims (free reshape): lane-axis reduce + lane-broadcast gate.
    # NOTE: for lane-dense (unmasked) stores, HW should be a multiple of 128.
    x_flat = x.reshape(B, C, HW)

    band_dtype = jnp.bfloat16 if x.dtype == jnp.bfloat16 else jnp.float32
    band_t = _conv_band_t(conv_weight, C).astype(band_dtype)         # (C, C)

    itemsize = jnp.dtype(x.dtype).itemsize
    band_bytes = C * C * jnp.dtype(band_dtype).itemsize
    BB, vmem_limit = _pick_batch_block(B, C, HW, itemsize, band_bytes)

    out_flat = pl.pallas_call(
        _eca_kernel,
        out_shape=jax.ShapeDtypeStruct((B, C, HW), x.dtype),
        grid_spec=pltpu.PrefetchScalarGridSpec(
            num_scalar_prefetch=0,
            grid=(B // BB,),
            in_specs=[
                # Grid-invariant band: constant index_map => DMA'd once, stays resident.
                pl.BlockSpec((C, C), lambda b: (0, 0)),
                pl.BlockSpec((BB, C, HW), lambda b: (b, 0, 0)),
            ],
            out_specs=pl.BlockSpec((BB, C, HW), lambda b: (b, 0, 0)),
        ),
        compiler_params=pltpu.CompilerParams(
            dimension_semantics=("parallel",),
            vmem_limit_bytes=vmem_limit,
        ),
        input_output_aliases=({1: 0} if donate_x else {}),
    )(band_t, x_flat)

    return out_flat.reshape(B, C, H, W)


def eca_reference(x, conv_weight):
    """Pure-JAX reference matching the PyTorch module."""
    w = conv_weight.reshape(-1).astype(jnp.float32)
    y = x.astype(jnp.float32).mean(axis=(2, 3))                      # (B, C)
    yp = jnp.pad(y, ((0, 0), (1, 1)))                                # zero pad over C
    conv = w[0] * yp[:, :-2] + w[1] * yp[:, 1:-1] + w[2] * yp[:, 2:]
    gate = jax.nn.sigmoid(conv).astype(x.dtype)                      # (B, C)
    return x * gate[:, :, None, None]


if __name__ == "__main__":
    key = jax.random.PRNGKey(0)
    kx, kw = jax.random.split(key)

    # Small, TPU-friendly shapes: C multiple of 8 (sublanes), H*W = 256 is a
    # multiple of 128 (lane-dense, unmasked stores).
    B, C, H, W = 2, 16, 16, 16
    x = jax.random.normal(kx, (B, C, H, W), dtype=jnp.float32)

    # Conv1d(1, 1, kernel_size=3, bias=False) -> weight (1, 1, 3), flattened to (3,).
    conv_weight = jax.random.normal(kw, (3,), dtype=jnp.float32) * 0.5

    out = jax.block_until_ready(eca_forward(x, conv_weight))
    ref = eca_reference(x, conv_weight)
    assert jnp.allclose(out, ref, atol=1e-5, rtol=1e-5), "mismatch vs reference"

    print("KERNEL_OK")
</pallas_src>

<mosaic_0001>
module attributes {stable_mosaic.version = 11 : i64} {
  func.func @_eca_kernel(%arg0: i32, %arg1: memref<16x16xf32, #tpu.memory_space<vmem>>, %arg2: memref<1x16x256xf32, #tpu.memory_space<vmem>>, %arg3: memref<1x16x256xf32, #tpu.memory_space<vmem>>) attributes {dimension_semantics = [#tpu.dimension_semantics<parallel>], iteration_bounds = array<i64: 2>, scalar_prefetch = 0 : i64, scratch_operands = 0 : i64, tpu.core_type = #tpu.core_type<tc>, window_params = [{pipeline_mode = #tpu.pipeline_mode<synchronous>, transform_indices = @transform_0, window_bounds = array<i64: 16, 16>}, {transform_indices = @transform_1, window_bounds = array<i64: 1, 16, 256>}, {transform_indices = @transform_2, window_bounds = array<i64: 1, 16, 256>}]} {
    %c0 = arith.constant 0 : index
    %c0_0 = arith.constant 0 : index
    %c0_1 = arith.constant 0 : index
    %0 = vector.load %arg2[%c0, %c0_0, %c0_1] : memref<1x16x256xf32, #tpu.memory_space<vmem>>, vector<1x16x256xf32>
    %cst = arith.constant dense<0.000000e+00> : vector<1x16xf32>
    %1 = vector.multi_reduction <add>, %0, %cst [2] : vector<1x16x256xf32> to vector<1x16xf32>
    %cst_2 = arith.constant 2.560000e+02 : f32
    %2 = vector.broadcast %cst_2 : f32 to vector<1x16xf32>
    %3 = arith.divf %1, %2 : vector<1x16xf32>
    %c0_3 = arith.constant 0 : index
    %c0_4 = arith.constant 0 : index
    %4 = vector.load %arg1[%c0_3, %c0_4] : memref<16x16xf32, #tpu.memory_space<vmem>>, vector<16x16xf32>
    %cst_5 = arith.constant dense<0.000000e+00> : vector<1x16xf32>
    %5 = tpu.matmul %3, %4, %cst_5 {dimension_numbers = #tpu.dot_dimension_numbers<[1], [0], [0], [1], [0, 0, 1, 1], [], []>} : vector<1x16xf32>, vector<16x16xf32>, vector<1x16xf32> -> vector<1x16xf32>
    %6 = arith.negf %5 : vector<1x16xf32>
    %7 = math.exp %6 : vector<1x16xf32>
    %cst_6 = arith.constant 1.000000e+00 : f32
    %8 = vector.broadcast %cst_6 : f32 to vector<1x16xf32>
    %9 = arith.addf %8, %7 : vector<1x16xf32>
    %10 = arith.divf %8, %9 : vector<1x16xf32>
    %11 = vector.shape_cast %10 : vector<1x16xf32> to vector<1x16x1xf32>
    %12 = vector.broadcast %11 : vector<1x16x1xf32> to vector<1x16x256xf32>
    %13 = arith.mulf %0, %12 : vector<1x16x256xf32>
    %c0_7 = arith.constant 0 : index
    %c0_8 = arith.constant 0 : index
    %c0_9 = arith.constant 0 : index
    %14 = vector.load %arg3[%c0_7, %c0_8, %c0_9] : memref<1x16x256xf32, #tpu.memory_space<vmem>>, vector<1x16x256xf32>
    tpu.vector_store %arg3[%c0_7, %c0_8, %c0_9], %13 {strides = array<i32>} : memref<1x16x256xf32, #tpu.memory_space<vmem>>, vector<1x16x256xf32>,
    return
  }
  func.func @transform_0(%arg0: i32) -> (i32, i32) {
    %c0_i32 = arith.constant 0 : i32
    %c0_i32_0 = arith.constant 0 : i32
    %c0_i32_1 = arith.constant 0 : i32
    return %c0_i32, %c0_i32_0 : i32, i32
  }
  func.func @transform_1(%arg0: i32) -> (i32, i32, i32) {
    %c0_i32 = arith.constant 0 : i32
    %c0_i32_0 = arith.constant 0 : i32
    %c0_i32_1 = arith.constant 0 : i32
    return %arg0, %c0_i32, %c0_i32_0 : i32, i32, i32
  }
  func.func @transform_2(%arg0: i32) -> (i32, i32, i32) {
    %c0_i32 = arith.constant 0 : i32
    %c0_i32_0 = arith.constant 0 : i32
    %c0_i32_1 = arith.constant 0 : i32
    return %arg0, %c0_i32, %c0_i32_0 : i32, i32, i32
  }
}

</mosaic_0001>

<llo_original>
// kernel: tpu_custom_call.1
$region0: #{tpu_custom_call.1}
  #allocation0 [shape = 'u32[]', space=smem, size = 0x4, offset = 0x4, fixed_abs, tag = 'smem constant byte address 0x4 - core index']
  #allocation1 [shape = 'u32[144,128]{1,0:T(1,128)}', space=vmem, size = 0x12000, scoped, tag = 'internal scratch']
  %s0 = inlined_call_operand.hbm [shape: f32[16,16], index: 0, kind: input, shape index: {}]
  %s1 = inlined_call_operand.hbm [shape: f32[2,16,256], index: 1, kind: input, shape index: {}]
  %s2 = inlined_call_operand.hbm [shape: f32[2,16,256], index: 2, kind: output, shape index: {}]
  %s3 = sld [smem:[#allocation0]]
  $region49: #{tpu_custom_call.1} parent=0
    _
  %s5 = ssub.s32 1, %s3
  %s6 = scalar_select 0, %s5, %s3
  $region1: #{tpu_custom_call.1} parent=0
    #allocation2 [shape = 'u8[8192]{0}', space=vmem, size = 0x2000, scoped, tag = 'input window, operand 0, single buffered']
    #allocation3 [shape = 's32[2]{0}', space=sflag, size = 0x8, scoped, tag = 'scoped memory for tpu_custom_call.1']
    #allocation4 [shape = 's32[2]{0}', space=sflag, size = 0x8, scoped, tag = 'scoped memory for tpu_custom_call.1']
    #allocation5 [shape = 'u8[32768]{0}', space=vmem, size = 0x8000, scoped, tag = 'input window, operand 1']
    #allocation6 [shape = 's32[2]{0}', space=sflag, size = 0x8, scoped, tag = 'scoped memory for tpu_custom_call.1']
    #allocation7 [shape = 'u8[32768]{0}', space=vmem, size = 0x8000, scoped, tag = 'output window, operand 0']
    %7 = vsyncpa [#allocation3], 0
    %8 = vsyncpa [#allocation6], 0
    %s9 = scalar_lea.sflag [#allocation6], 1
    %10 = vsyncpa %s9, 0
    %11 = vsyncpa [#allocation4], 0
    %s12 = scalar_lea.sflag [#allocation4], 1
    %13 = vsyncpa %s12, 0
    loop: start=0, step=1, limit=4
    $region2: #{tpu_custom_call.1} parent=1 // loop_pre_header
      _
    $region3: #{tpu_custom_call.1} parent=1 // loop_header
      %s15 = sphi 0, %s19
      %p16 = scmp.ge.s32.totalorder %s15, 4
      %s23 = sphi 0, %s23
      %s25 = sphi 0, %s23
      %s26 = sphi 0, %s25
      %s40 = sphi 0, %s26
      %s46 = sphi 0, %s48
      %s49 = sphi 0, %s46
      %s50 = sphi 0, %s49
      %s66 = sphi 0, %s50
      %s72 = sphi 0, %s74
      %s75 = sphi 0, %s72
      %s76 = sphi 0, %s75
      %s92 = sphi 0, %s76
    $region4: #{tpu_custom_call.1} parent=1 // loop_header_branch
      %18 = sbr.rel (%p16) target = $region8
    $region5: #{tpu_custom_call.1} parent=1 // loop_body
      %s20 = ssub.s32 %s15, 1
      %s21 = ssub.s32 %s15, 2
      %s22 = sadd.s32 %s15, 1
      %s24 = sadd.s32 %s23, 1
      %p27 = scmp.eq.s32.totalorder %s15, 1
      %p28 = scmp.ne.s32.totalorder %s23, %s25
      %p29 = scmp.eq.s32.totalorder %s15, 0
      %p30 = por %p28, %p29
      %p31 = scmp.ne.s32.totalorder %s23, %s25
      %p32 = scmp.eq.s32.totalorder %s20, 1
      %p33 = por %p31, %p32
      %p34 = scmp.ne.s32.totalorder %s25, %s26
      %p35 = scmp.eq.s32.totalorder %s20, 0
      %p36 = por %p34, %p35
      %p37 = scmp.ne.s32.totalorder %s25, %s26
      %p38 = scmp.eq.s32.totalorder %s21, 1
      %p39 = por %p37, %p38
      %p41 = scmp.ne.s32.totalorder %s26, %s40
      %p42 = scmp.eq.s32.totalorder %s21, 0
      %p43 = por %p41, %p42
      %s44 = ssub.s32 %s15, %s22
      %p45 = scmp.eq.s32.totalorder %s44, 0
      %s47 = sadd.s32 %s46, 1
      %s48 = scalar_select %p45, %s46, %s47
      %p51 = pneg %p45
      %p52 = scmp.eq.s32.totalorder %s15, 1
      %p53 = por %p51, %p52
      %p54 = scmp.ne.s32.totalorder %s46, %s49
      %p55 = scmp.eq.s32.totalorder %s15, 0
      %p56 = por %p54, %p55
      %p57 = scmp.ne.s32.totalorder %s46, %s49
      %p58 = scmp.eq.s32.totalorder %s20, 1
      %p59 = por %p57, %p58
      %p60 = scmp.ne.s32.totalorder %s49, %s50
      %p61 = scmp.eq.s32.totalorder %s20, 0
      %p62 = por %p60, %p61
      %p63 = scmp.ne.s32.totalorder %s49, %s50
      %p64 = scmp.eq.s32.totalorder %s21, 1
      %p65 = por %p63, %p64
      %p67 = scmp.ne.s32.totalorder %s50, %s66
      %p68 = scmp.eq.s32.totalorder %s21, 0
      %p69 = por %p67, %p68
      %s70 = ssub.s32 %s15, %s22
      %p71 = scmp.eq.s32.totalorder %s70, 0
      %s73 = sadd.s32 %s72, 1
      %s74 = scalar_select %p71, %s72, %s73
      %p77 = pneg %p71
      %p78 = scmp.eq.s32.totalorder %s15, 1
      %p79 = por %p77, %p78
      %p80 = scmp.ne.s32.totalorder %s72, %s75
      %p81 = scmp.eq.s32.totalorder %s15, 0
      %p82 = por %p80, %p81
      %p83 = scmp.ne.s32.totalorder %s72, %s75
      %p84 = scmp.eq.s32.totalorder %s20, 1
      %p85 = por %p83, %p84
      %p86 = scmp.ne.s32.totalorder %s75, %s76
      %p87 = scmp.eq.s32.totalorder %s20, 0
      %p88 = por %p86, %p87
      %p89 = scmp.ne.s32.totalorder %s75, %s76
      %p90 = scmp.eq.s32.totalorder %s21, 1
      %p91 = por %p89, %p90
      %p93 = scmp.ne.s32.totalorder %s76, %s92
      %p94 = scmp.eq.s32.totalorder %s21, 0
      %p95 = por %p93, %p94
      %p96 = scmp.le.s32.totalorder 1, %s15
      %p97 = scmp.lt.s32.totalorder %s15, 3
      %p98 = pnand %p96, %p97
      %p99 = pneg %p98
      // Predicated region
      $region9: #{tpu_custom_call.1} parent=5 // pred_check
        _
      $region10: #{tpu_custom_call.1} parent=5 // pred_check_branch
        %101 = sbr.rel (%p98) target = $region12
      $region11: #{tpu_custom_call.1} parent=5 // pred_region
        %s102 = ssub.s32 %s15, 1
        // Predicated region
        $region13: #{tpu_custom_call.1} parent=11 // pred_check
          %p103 = pneg %p36
        $region14: #{tpu_custom_call.1} parent=11 // pred_check_branch
          %105 = sbr.rel (%p103) target = $region16
        $region15: #{tpu_custom_call.1} parent=11 // pred_region
          %s107 = ssub.s32 256, 256
          %108 = vsyncadd [#allocation3], %s107
          %s109 = sshll.u32 [#allocation2], 4
          %s110 = int_to_ptr.vmem [resolvable:$true] %s109
          %115 = dma.hbm_to_vmem [thread:$0]  %s0, 256, %s110, [#allocation3], 128, 128, 8
        $region16: #{tpu_custom_call.1} parent=11 // pred_fallthru
          _
      $region12: #{tpu_custom_call.1} parent=5 // pred_fallthru
        _
      %p116 = scmp.lt.s32.totalorder %s15, 2
      // Predicated region
      $region17: #{tpu_custom_call.1} parent=5 // pred_check
        %p117 = pneg %p116
      $region18: #{tpu_custom_call.1} parent=5 // pred_check_branch
        %119 = sbr.rel (%p117) target = $region20
      $region19: #{tpu_custom_call.1} parent=5 // pred_region
        // Predicated region
        $region21: #{tpu_custom_call.1} parent=19 // pred_check
          %p120 = pneg %p56
        $region22: #{tpu_custom_call.1} parent=19 // pred_check_branch
          %122 = sbr.rel (%p120) target = $region24
        $region23: #{tpu_custom_call.1} parent=19 // pred_region
          %s123 = sand.u32 %s46, 1
          %s124 = scalar_lea.sflag [#allocation6], %s123
          %s125 = sand.u32 %s46, 1
          %s126 = smul.addr %s125, 32
          %s127 = scalar_lea.vmem [#allocation5], %s126
          %s129 = ssub.s32 512, 512
          %130 = vsyncadd %s124, %s129
          %s131 = smul.addr %s15, 4
          %s132 = smul.addr %s131, 128
          %s133 = scalar_lea.hbm %s1, %s132
          %s134 = sshll.u32 %s127, 4
          %s135 = int_to_ptr.vmem [resolvable:$true] %s134
          %140 = dma.hbm_to_vmem [thread:$0]  %s133, 512, %s135, %s124, 256, 256, 16
        $region24: #{tpu_custom_call.1} parent=19 // pred_fallthru
          _
      $region20: #{tpu_custom_call.1} parent=5 // pred_fallthru
        _
      %p141 = scmp.le.s32.totalorder 1, %s15
      %p142 = scmp.lt.s32.totalorder %s15, 3
      %p143 = pnand %p141, %p142
      %p144 = pneg %p143
      // Predicated region
      $region25: #{tpu_custom_call.1} parent=5 // pred_check
        _
      $region26: #{tpu_custom_call.1} parent=5 // pred_check_branch
        %146 = sbr.rel (%p143) target = $region28
      $region27: #{tpu_custom_call.1} parent=5 // pred_region
        %s147 = ssub.s32 %s15, 1
        // Predicated region
        $region29: #{tpu_custom_call.1} parent=27 // pred_check
          %p148 = pneg %p36
        $region30: #{tpu_custom_call.1} parent=27 // pred_check_branch
          %150 = sbr.rel (%p148) target = $region32
        $region31: #{tpu_custom_call.1} parent=27 // pred_region
          %151 = dma.done [#allocation3], 256
        $region32: #{tpu_custom_call.1} parent=27 // pred_fallthru
          _
        %s152 = sand.u32 %s49, 1
        %s153 = scalar_lea.sflag [#allocation6], %s152
        %s154 = sand.u32 %s49, 1
        %s155 = smul.addr %s154, 32
        %s156 = scalar_lea.vmem [#allocation5], %s155
        // Predicated region
        $region33: #{tpu_custom_call.1} parent=27 // pred_check
          %p157 = pneg %p62
        $region34: #{tpu_custom_call.1} parent=27 // pred_check_branch
          %159 = sbr.rel (%p157) target = $region36
        $region35: #{tpu_custom_call.1} parent=27 // pred_region
          %160 = dma.done %s153, 512
        $region36: #{tpu_custom_call.1} parent=27 // pred_fallthru
          _
        %p161 = pneg %p36
        %p162 = pneg %p33
        %s163 = sand.u32 %s49, 1
        %s164 = scalar_lea.sflag [#allocation6], %s163
        %s165 = sand.u32 %s49, 1
        %s166 = smul.addr %s165, 32
        %s167 = scalar_lea.vmem [#allocation5], %s166
        %p168 = pneg %p62
        %p169 = pneg %p59
        %p170 = pneg %p88
        %p171 = pneg %p85
        %s172 = sand.u32 %s75, 1
        %s173 = scalar_lea.sflag [#allocation4], %s172
        %s174 = sand.u32 %s75, 1
        %s175 = smul.addr %s174, 32
        %s176 = scalar_lea.vmem [#allocation7], %s175
        %v177 = vld [vmem:[%s156] sm:$0xff]
        %v178 = vld [vmem:[%s156 + $0x8] sm:$0xff]
        %v179 = vld [vmem:[%s156 + $0x10] sm:$0xff]
        %v180 = vld [vmem:[%s156 + $0x18] sm:$0xff]
        %v181 = vadd.f32 %v177, %v178
        %182 = vadd.xlane.f32.xlu0 %v181
        %v183 = vpop.xlane.xlu0 %182
        %v184 = vadd.f32 %v179, %v180
        %185 = vadd.xlane.f32.xlu0 %v184
        %v186 = vpop.xlane.xlu0 %185
        %v187 = vrcp.pop 256.0
        %v188 = vmul.f32 %v183, %v187
        %v189 = vmul.f32 %v186, %v187
        %v190 = vld [vmem:[#allocation2] sm:$0xff]
        %v191 = vld [vmem:[#allocation2 + $0x8] sm:$0xff]
        %v194 = vlaneseq
        %v195 = vand.u32 %v194, 127
        %v196 = vlaneseq
        %v197 = vshrl.u32 %v196, 7
        %v198 = vsub.s32 %v195, %v197
        %v199 = vrot.slane %v188, %v198
        %v200 = vadd.s32 %v195, 4294967288
        %v201 = vlaneseq
        %v202 = vshrl.u32 %v201, 7
        %v203 = vsub.s32 %v200, %v202
        %v204 = vrot.slane %v189, %v203
        %vm205 = vcmask 130112
        %v206 = vsel %vm205, %v204, %v199
        %vm207 = vcmask 130048
        %v208 = vsel %vm207, %v206, 0
        %210 = vmatprep.subr.mxu0 0.0
        %211 = vmatpush1.msra.mxu0 %v190
        %212 = vmatprep.subr.mxu0 0.0
        %213 = vmatpush1.msra.mxu0 %v191
        %214 = vmatprep.subr.mxu0 0.0
        %215 = vmatpush1.msra.mxu0 0.0
        %216 = vmatprep.subr.mxu0 0.0
        %217 = vmatpush1.msra.mxu0 0.0
        %218 = vmatprep.subr.mxu0 0.0
        %219 = vmatpush1.msra.mxu0 0.0
        %220 = vmatprep.subr.mxu0 0.0
        %221 = vmatpush1.msra.mxu0 0.0
        %222 = vmatprep.subr.mxu0 0.0
        %223 = vmatpush1.msra.mxu0 0.0
        %224 = vmatprep.subr.mxu0 0.0
        %225 = vmatpush1.msra.mxu0 0.0
        %226 = vmatprep.subr.mxu0 0.0
        %227 = vmatpush1.msra.mxu0 0.0
        %228 = vmatprep.subr.mxu0 0.0
        %229 = vmatpush1.msra.mxu0 0.0
        %230 = vmatprep.subr.mxu0 0.0
        %231 = vmatpush1.msra.mxu0 0.0
        %232 = vmatprep.subr.mxu0 0.0
        %233 = vmatpush1.msra.mxu0 0.0
        %234 = vmatprep.subr.mxu0 0.0
        %235 = vmatpush1.msra.mxu0 0.0
        %236 = vmatprep.subr.mxu0 0.0
        %237 = vmatpush1.msra.mxu0 0.0
        %238 = vmatprep.subr.mxu0 0.0
        %239 = vmatpush1.msra.mxu0 0.0
        %240 = vmatprep.subr.mxu0 0.0
        %241 = vmatpush1.msra.mxu0 0.0
        %242 = vmatprep.subr.mxu0 0.0
        %243 = vmatpush1.msra.mxu0 0.0
        %244 = vmatprep.subr.mxu0 0.0
        %245 = vmatpush1.msra.mxu0 0.0
        %246 = vmatprep.subr.mxu0 0.0
        %247 = vmatpush1.msra.mxu0 0.0
        %248 = vmatprep.subr.mxu0 0.0
        %249 = vmatpush1.msra.mxu0 0.0
        %250 = vmatprep.subr.mxu0 0.0
        %251 = vmatpush1.msra.mxu0 0.0
        %252 = vmatprep.subr.mxu0 0.0
        %253 = vmatpush1.msra.mxu0 0.0
        %254 = vmatprep.subr.mxu0 0.0
        %255 = vmatpush1.msra.mxu0 0.0
        %256 = vmatprep.subr.mxu0 0.0
        %257 = vmatpush1.msra.mxu0 0.0
        %258 = vmatprep.subr.mxu0 0.0
        %259 = vmatpush1.msra.mxu0 0.0
        %260 = vmatprep.subr.mxu0 0.0
        %261 = vmatpush1.msra.mxu0 0.0
        %262 = vmatprep.subr.mxu0 0.0
        %263 = vmatpush1.msra.mxu0 0.0
        %264 = vmatprep.subr.mxu0 0.0
        %265 = vmatpush1.msra.mxu0 0.0
        %266 = vmatprep.subr.mxu0 0.0
        %267 = vmatpush1.msra.mxu0 0.0
        %268 = vmatprep.subr.mxu0 0.0
        %269 = vmatpush1.msra.mxu0 0.0
        %270 = vmatprep.subr.mxu0 0.0
        %271 = vmatpush1.msra.mxu0 0.0
        %272 = vmatprep.subr.mxu0 0.0
        %273 = vmatpush1.msra.mxu0 0.0
        %274 = vmatprep.mubr.f32.mxu0 0.0
        %275 = vmatmul.mubr.f32.gmra.mrb[0].mxu0 %v208
        %v276 = vpop.f32.mrb[0].mxu0
        %v277 = vadd.f32 0.0, %v276
        %v278 = vpop.f32.mrb[0].mxu0
        %279 = vdwg.mxu0
        %v280 = vxor.u32 %v277, 2147483648
        %v281 = vmul.f32 %v280, 1.442695
        %v282 = vpow.pop %v281
        %v283 = vadd.f32 %v282, 1.0
        %v284 = vrcp.pop %v283
        %v285 = vmul.f32 1.0, %v284
        %v286 = vlaneseq
        %v287 = vshrl.u32 %v286, 7
        %v288 = vsub.s32 0, %v287
        %v289 = vrot.slane %v285, %v288
        %291 = vbcast.lane.b32.xlu0 %v289, 256
        %v292 = vpop.permute.xlu0 %291
        %s294 = sor.u32 256, 8
        %295 = vbcast.lane.b32.xlu0 %v289, %s294
        %v296 = vpop.permute.xlu0 %295
        %v297 = vmul.f32 %v177, %v292
        %v298 = vmul.f32 %v178, %v292
        %v299 = vmul.f32 %v179, %v296
        %v300 = vmul.f32 %v180, %v296
        %301 = vst [vmem:[%s176] sm:$0xff] %v297
        %302 = vst [vmem:[%s176 + $0x8] sm:$0xff] %v298
        %303 = vst [vmem:[%s176 + $0x10] sm:$0xff] %v299
        %304 = vst [vmem:[%s176 + $0x18] sm:$0xff] %v300
        %s305 = sand.u32 %s75, 1
        %s306 = scalar_lea.sflag [#allocation4], %s305
        %s307 = sand.u32 %s75, 1
        %s308 = smul.addr %s307, 32
        %s309 = scalar_lea.vmem [#allocation7], %s308
        // Predicated region
        $region37: #{tpu_custom_call.1} parent=27 // pred_check
          %p310 = pneg %p85
        $region38: #{tpu_custom_call.1} parent=27 // pred_check_branch
          %312 = sbr.rel (%p310) target = $region40
        $region39: #{tpu_custom_call.1} parent=27 // pred_region
          %s314 = ssub.s32 512, 512
          %315 = vsyncadd %s306, %s314
          %s316 = smul.addr %s20, 4
          %s317 = smul.addr %s316, 128
          %s318 = scalar_lea.hbm %s2, %s317
          %s319 = sshll.u32 %s309, 4
          %s320 = int_to_ptr.vmem [resolvable:$true] %s319
          %325 = dma.vmem_to_hbm [thread:$0]  %s320, 512, %s318, %s306, 256, 256, 16
        $region40: #{tpu_custom_call.1} parent=27 // pred_fallthru
          _
      $region28: #{tpu_custom_call.1} parent=5 // pred_fallthru
        _
      %p326 = scmp.le.s32.totalorder 2, %s15
      // Predicated region
      $region41: #{tpu_custom_call.1} parent=5 // pred_check
        %p327 = pneg %p326
      $region42: #{tpu_custom_call.1} parent=5 // pred_check_branch
        %329 = sbr.rel (%p327) target = $region44
      $region43: #{tpu_custom_call.1} parent=5 // pred_region
        %s330 = ssub.s32 %s15, 2
        // Predicated region
        $region45: #{tpu_custom_call.1} parent=43 // pred_check
          %p331 = pneg %p91
        $region46: #{tpu_custom_call.1} parent=43 // pred_check_branch
          %333 = sbr.rel (%p331) target = $region48
        $region47: #{tpu_custom_call.1} parent=43 // pred_region
          %s334 = sand.u32 %s76, 1
          %s335 = scalar_lea.sflag [#allocation4], %s334
          %s336 = sand.u32 %s76, 1
          %s337 = smul.addr %s336, 32
          %s338 = scalar_lea.vmem [#allocation7], %s337
          %339 = dma.done %s335, 512
        $region48: #{tpu_custom_call.1} parent=43 // pred_fallthru
          _
      $region44: #{tpu_custom_call.1} parent=5 // pred_fallthru
        _
    $region6: #{tpu_custom_call.1} parent=1 // loop_footer
      %s19 = sadd.s32 1, %s15
    $region7: #{tpu_custom_call.1} parent=1 // loop_footer_branch
      %14 = sbr.rel target = $region3
    $region8: #{tpu_custom_call.1} parent=1 // loop_exit
      _
    %340 = vsyncpa [#allocation3], 1
    %s341 = scalar_lea.sflag [#allocation3], 1
    %342 = vsyncpa %s341, 1
    %343 = vsyncpa [#allocation6], 1
    %s344 = scalar_lea.sflag [#allocation6], 1
    %345 = vsyncpa %s344, 1
    %346 = vsyncpa [#allocation4], 1
    %s347 = scalar_lea.sflag [#allocation4], 1
    %348 = vsyncpa %s347, 1

</llo_original>
